<compile_context>
chip_gen: v6e
topology: v6e:2x2x1
jax: 0.10.0
libtpu: 0.0.40
codegen_flags: <defaults>
</compile_context>

<pallas_src>
import math
import numpy as np
import jax
import jax.numpy as jnp
from jax.experimental import pallas as pl
from jax.experimental.pallas import tpu as pltpu


def _round_up(x, m):
    return ((x + m - 1) // m) * m


def _pick_row_tile(n, want, align=8):
    """Row tile that is a multiple of `align` and (when possible) yields >= 2
    grid steps (v7x has 2 TensorCores).  Caller pads n up to a multiple of the
    returned tile; the tile is never shrunk to a non-aligned size."""
    t = max(align, (min(want, n) // align) * align)
    if -(-n // t) < 2 and n > align:
        t = max(align, ((n // 2) // align) * align)
    return t


def _largest_divisor_tile(n, want):
    t = max(1, min(want, n))
    while n % t:
        t -= 1
    return t


# -----------------------------------------------------------------------------
# Kernel 1: LoRA-patched qkv projection (_LoRA_qkv.forward).
#   qkv = x @ Wqkv + b ;  qkv[:, :d] += (x@Aq)@Bq ;  qkv[:, -d:] += (x@Av)@Bv
# Frozen matmul in compute_dtype (bf16) with f32 MXU accumulation; the LoRA
# branch kept separate and computed in f32 (folding into a bf16 weight can
# round the low-rank delta away).  B is pre-scattered into the padded output
# column space so the delta adds directly onto the lane-dense output block.
# -----------------------------------------------------------------------------
def _qkv_kernel(x_ref, w_ref, b_ref, a_ref, bl_ref, o_ref):
    xf = x_ref[...].astype(jnp.float32)
    base = jnp.dot(xf.astype(w_ref.dtype), w_ref[...],
                   preferred_element_type=jnp.float32)
    lora = jnp.dot(jnp.dot(xf, a_ref[...], preferred_element_type=jnp.float32),
                   bl_ref[...], preferred_element_type=jnp.float32)
    o_ref[...] = (base + b_ref[...] + lora).astype(o_ref.dtype)


def prepare_qkv_weights(w_qkv, b_qkv, a_q, b_q, a_v, b_v, *,
                        compute_dtype=jnp.bfloat16):
    """One-time (hoisted) prep of the frozen qkv weight + packed LoRA factors.
    Output columns padded to a multiple of 128 for lane-dense stores."""
    d, three_d = w_qkv.shape
    ncol = _round_up(three_d, 128)
    rq, rv = a_q.shape[1], a_v.shape[1]
    r6 = rq + rv
    r6p = _round_up(r6, 8)
    a_cat = jnp.zeros((d, r6p), jnp.float32)
    a_cat = a_cat.at[:, :rq].set(a_q.astype(jnp.float32))
    a_cat = a_cat.at[:, rq:r6].set(a_v.astype(jnp.float32))
    b_sc = jnp.zeros((r6p, ncol), jnp.float32)
    b_sc = b_sc.at[:rq, :d].set(b_q.astype(jnp.float32))             # q slice
    b_sc = b_sc.at[rq:r6, 2 * d:3 * d].set(b_v.astype(jnp.float32))  # v slice
    w_c = jnp.zeros((d, ncol), compute_dtype)
    w_c = w_c.at[:, :three_d].set(w_qkv.astype(compute_dtype))
    bias = jnp.zeros((1, ncol), jnp.float32)
    bias = bias.at[0, :three_d].set(b_qkv.astype(jnp.float32))
    return dict(w=w_c, b=bias, a=a_cat, bl=b_sc, d=d, cols=three_d, ncol=ncol,
                r6p=r6p)


def lora_qkv(x_tokens, qkv_prep, *, tile_rows=256, max_col_tile=1536,
             out_dtype=None):
    """x_tokens: [N, dim] (any float dtype).  Returns [N, 3*dim] (q|k|v)."""
    n, d = x_tokens.shape
    assert d == qkv_prep["d"]
    ncol, r6p = qkv_prep["ncol"], qkv_prep["r6p"]
    if out_dtype is None:
        out_dtype = qkv_prep["w"].dtype
    tile_m = _pick_row_tile(n, tile_rows)
    n_rows = _round_up(n, tile_m)
    x2 = x_tokens if n_rows == n else jnp.pad(x_tokens,
                                              ((0, n_rows - n), (0, 0)))
    # Tile the output-column axis so resident VMEM stays bounded at real SAM
    # dims (dim~1152+) -- at demo size it is a single 128-wide block.
    tile_n = ncol if ncol <= max_col_tile else (max_col_tile // 128) * 128
    while ncol % tile_n:
        tile_n -= 128
    grid = (n_rows // tile_m, ncol // tile_n)

    cost = pl.CostEstimate(
        flops=2 * n_rows * d * ncol + 2 * n_rows * d * r6p
              + 2 * n_rows * r6p * ncol,
        transcendentals=0,
        bytes_accessed=(n_rows * d * x2.dtype.itemsize
                        + d * ncol * jnp.dtype(qkv_prep["w"].dtype).itemsize
                        + n_rows * ncol * jnp.dtype(out_dtype).itemsize))

    out = pl.pallas_call(
        _qkv_kernel,
        out_shape=jax.ShapeDtypeStruct((n_rows, ncol), out_dtype),
        grid_spec=pltpu.PrefetchScalarGridSpec(
            num_scalar_prefetch=0,
            grid=grid,
            in_specs=[
                pl.BlockSpec((tile_m, d), lambda i, j: (i, 0)),
                pl.BlockSpec((d, tile_n), lambda i, j: (0, j)),
                pl.BlockSpec((1, tile_n), lambda i, j: (0, j)),
                pl.BlockSpec((d, r6p), lambda i, j: (0, 0)),
                pl.BlockSpec((r6p, tile_n), lambda i, j: (0, j)),
            ],
            out_specs=pl.BlockSpec((tile_m, tile_n), lambda i, j: (i, j)),
        ),
        compiler_params=pltpu.CompilerParams(
            dimension_semantics=("parallel", "parallel")),
        cost_estimate=cost,
    )(x2, qkv_prep["w"], qkv_prep["b"], qkv_prep["a"], qkv_prep["bl"])
    return out[:n, :qkv_prep["cols"]]


# -----------------------------------------------------------------------------
# Kernel 2: 1x1 conv (pointwise) fused with the FPN residual add:
#   out = x @ W + b + residual          (fpn_merge / final_merge in fpn_fuse)
# Mem-bound: bf16 output, residual read in its native (bf16) dtype, activation
# cast to the weight dtype inside the kernel (no wrapper cast pass).
# -----------------------------------------------------------------------------
def _pointwise_conv_add_kernel(x_ref, w_ref, b_ref, r_ref, o_ref):
    acc = jnp.dot(x_ref[...].astype(w_ref.dtype), w_ref[...],
                  preferred_element_type=jnp.float32)
    o_ref[...] = (acc + b_ref[...]
                  + r_ref[...].astype(jnp.float32)).astype(o_ref.dtype)


def prepare_conv1x1_weights(w_io, bias, *, compute_dtype=jnp.bfloat16):
    return dict(w=w_io.astype(compute_dtype),
                b=bias.reshape(1, -1).astype(jnp.float32))


def conv1x1_add(x_nhwc, prep, residual_nhwc, *, tile_rows=1024, out_dtype=None):
    bsz, h, w, cin = x_nhwc.shape
    cout = prep["w"].shape[1]
    if out_dtype is None:
        out_dtype = prep["w"].dtype
    n = bsz * h * w
    tile = _pick_row_tile(n, tile_rows)
    n_rows = _round_up(n, tile)
    x2 = x_nhwc.reshape(n, cin)
    r2 = residual_nhwc.reshape(n, cout)
    if n_rows != n:
        x2 = jnp.pad(x2, ((0, n_rows - n), (0, 0)))
        r2 = jnp.pad(r2, ((0, n_rows - n), (0, 0)))

    cost = pl.CostEstimate(
        flops=2 * n_rows * cin * cout,
        transcendentals=0,
        bytes_accessed=(n_rows * cin * x2.dtype.itemsize
                        + n_rows * cout * r2.dtype.itemsize
                        + n_rows * cout * jnp.dtype(out_dtype).itemsize
                        + cin * cout * jnp.dtype(prep["w"].dtype).itemsize))

    out = pl.pallas_call(
        _pointwise_conv_add_kernel,
        out_shape=jax.ShapeDtypeStruct((n_rows, cout), out_dtype),
        grid_spec=pltpu.PrefetchScalarGridSpec(
            num_scalar_prefetch=0,
            grid=(n_rows // tile,),
            in_specs=[
                pl.BlockSpec((tile, cin), lambda i: (i, 0)),
                pl.BlockSpec((cin, cout), lambda i: (0, 0)),
                pl.BlockSpec((1, cout), lambda i: (0, 0)),
                pl.BlockSpec((tile, cout), lambda i: (i, 0)),
            ],
            out_specs=pl.BlockSpec((tile, cout), lambda i: (i, 0)),
        ),
        compiler_params=pltpu.CompilerParams(dimension_semantics=("parallel",)),
        cost_estimate=cost,
    )(x2, prep["w"], prep["b"], r2)
    if n_rows != n:
        out = out[:n]
    return out.reshape(bsz, h, w, cout)


# -----------------------------------------------------------------------------
# Kernel 3: 3x3 conv, stride 1, padding 1 (final conv of fpn_fuse).
# No wrapper-side halo tiles: each grid step manually DMAs its overlapping
# [ht+2, w+2, cin] window straight from the padded HBM activation, double
# buffered (prefetch of row-tile r+1 overlaps the compute of row-tile r).
# Cout=5 is padded only to 8 lanes, so output RMW / writeback traffic is ~16x
# smaller than a 128-lane padded output.
# -----------------------------------------------------------------------------
def prepare_conv3x3_weights(w_kkio, bias, *, compute_dtype=jnp.bfloat16):
    cin, cout = w_kkio.shape[2], w_kkio.shape[3]
    cp = _round_up(cout, 8)
    w9 = jnp.zeros((9, cin, cp), compute_dtype)
    w9 = w9.at[:, :, :cout].set(
        w_kkio.reshape(9, cin, cout).astype(compute_dtype))
    bp = jnp.zeros((1, cp), jnp.float32).at[0, :cout].set(
        bias.astype(jnp.float32))
    return dict(w9=w9, b=bp, cin=cin, cout=cout, cp=cp)


def conv3x3_same(x_nhwc, prep, *, rows_per_tile=16):
    bsz, h, w, cin = x_nhwc.shape
    assert cin == prep["cin"]
    cp, cout = prep["cp"], prep["cout"]
    cdtype = prep["w9"].dtype
    ht = _largest_divisor_tile(h, rows_per_tile)
    ntr = h // ht
    rows_out = ht * w
    assert rows_out % 8 == 0, "ht * w must be a multiple of 8"

    # Single required zero-pad of the activation; no duplicated halo copies.
    xp = jnp.pad(x_nhwc.astype(cdtype), ((0, 0), (1, 1), (1, 1), (0, 0)))

    def kernel(x_hbm, w_ref, b_ref, o_ref, xbuf, sem):
        b_i = pl.program_id(0)
        r = pl.program_id(1)
        slot = r % 2

        def issue(row_tile, s):
            pltpu.make_async_copy(
                x_hbm.at[b_i, pl.ds(row_tile * ht, ht + 2)],
                xbuf.at[s], sem.at[s]).start()

        @pl.when(r == 0)
        def _():
            issue(0, 0)

        @pl.when(r + 1 < ntr)            # prefetch the next row tile
        def _():
            issue(r + 1, 1 - slot)

        pltpu.make_async_copy(x_hbm.at[b_i, pl.ds(0, ht + 2)],
                              xbuf.at[slot], sem.at[slot]).wait()

        # cp is only 8 lanes wide, so each accumulation pass over the f32
        # output block is tiny.
        o_ref[...] = jnp.broadcast_to(b_ref[...], (rows_out, cp))
        for dx in range(3):
            # One W-shifted slab per dx (3 slab loads per block, not 9).
            # TODO(synk): dx=1,2 slab starts are sublane-misaligned; a
            # pltpu.roll along W would move the realign onto the idle XLU.
            xs = xbuf[slot, :, dx:dx + w, :]             # [ht+2, w, cin]
            for dy in range(3):
                patch = xs[dy:dy + ht].reshape(rows_out, cin)
                o_ref[...] += jnp.dot(patch, w_ref[dy * 3 + dx],
                                      preferred_element_type=jnp.float32)

    cost = pl.CostEstimate(
        flops=2 * bsz * h * w * cin * cp * 9,
        transcendentals=0,
        bytes_accessed=(bsz * ntr * (ht + 2) * (w + 2) * cin
                        * jnp.dtype(cdtype).itemsize
                        + 9 * cin * cp * jnp.dtype(cdtype).itemsize
                        + bsz * h * w * cp * 4))

    out = pl.pallas_call(
        kernel,
        out_shape=jax.ShapeDtypeStruct((bsz * h * w, cp), jnp.float32),
        grid_spec=pltpu.PrefetchScalarGridSpec(
            num_scalar_prefetch=0,
            grid=(bsz, ntr),
            in_specs=[
                pl.BlockSpec(memory_space=pl.ANY),       # padded activation
                pl.BlockSpec((9, cin, cp), lambda b, r: (0, 0, 0)),
                pl.BlockSpec((1, cp), lambda b, r: (0, 0)),
            ],
            out_specs=pl.BlockSpec((rows_out, cp),
                                   lambda b, r: (b * ntr + r, 0)),
            scratch_shapes=[
                pltpu.VMEM((2, ht + 2, w + 2, cin), cdtype),
                pltpu.SemaphoreType.DMA((2,)),
            ],
        ),
        compiler_params=pltpu.CompilerParams(
            dimension_semantics=("parallel", "arbitrary")),
        cost_estimate=cost,
    )(xp, prep["w9"], prep["b"])
    return out.reshape(bsz, h, w, cp)[..., :cout]


# -----------------------------------------------------------------------------
# Parameters (deterministic, matching the PyTorch init semantics) + hoisted prep
# -----------------------------------------------------------------------------
def init_lora_sam_params(key, *, dim=32, r=4):
    ks = jax.random.split(key, 12)
    kq = 1.0 / math.sqrt(dim)
    p = {}
    # frozen qkv linear of the attention block (stored transposed: [dim, 3*dim])
    p["w_qkv"] = jax.random.uniform(ks[0], (dim, 3 * dim), jnp.float32, -kq, kq)
    p["b_qkv"] = jax.random.uniform(ks[1], (3 * dim,), jnp.float32, -kq, kq)
    # LoRA A (kaiming_uniform(a=sqrt(5)) -> U(+-1/sqrt(dim))); three branches
    # per projection, rank-concatenated to [dim, 3r] / [3r, dim].
    ab = 1.0 / math.sqrt(dim)
    p["a_q"] = jax.random.uniform(ks[2], (dim, 3 * r), jnp.float32, -ab, ab)
    p["a_v"] = jax.random.uniform(ks[3], (dim, 3 * r), jnp.float32, -ab, ab)
    # LoRA B: zeros (reset_parameters)
    p["b_q"] = jnp.zeros((3 * r, dim), jnp.float32)
    p["b_v"] = jnp.zeros((3 * r, dim), jnp.float32)
    # stand-in patch embed for the (unavailable) Hiera trunk stem
    p["patch_embed"] = jax.random.normal(ks[4], (3, dim), jnp.float32) * 0.1

    def conv2d_init(kw, kb, cin, cout, ksz):
        bound = 1.0 / math.sqrt(cin * ksz * ksz)
        shape = (cin, cout) if ksz == 1 else (ksz, ksz, cin, cout)
        w = jax.random.uniform(kw, shape, jnp.float32, -bound, bound)
        b = jax.random.uniform(kb, (cout,), jnp.float32, -bound, bound)
        return w, b

    # fpn_fuse convs (the PyTorch code builds fresh nn.Conv2d each call; here
    # they are built once, deterministically).
    p["fpn_hr0_w"], p["fpn_hr0_b"] = conv2d_init(ks[5], ks[6], 32, 256, 1)
    p["fpn_hr1_w"], p["fpn_hr1_b"] = conv2d_init(ks[7], ks[8], 64, 256, 1)
    p["fpn_out_w"], p["fpn_out_b"] = conv2d_init(ks[9], ks[10], 256, 5, 3)
    return p


def prepare_inference_params(params, *, compute_dtype=jnp.bfloat16):
    """One-time weight prep (casts / padding / LoRA packing) for the frozen
    inference weights -- hoisted out of the per-call forward path."""
    return dict(
        qkv=prepare_qkv_weights(params["w_qkv"], params["b_qkv"],
                                params["a_q"], params["b_q"],
                                params["a_v"], params["b_v"],
                                compute_dtype=compute_dtype),
        fpn_hr0=prepare_conv1x1_weights(params["fpn_hr0_w"],
                                        params["fpn_hr0_b"],
                                        compute_dtype=compute_dtype),
        fpn_hr1=prepare_conv1x1_weights(params["fpn_hr1_w"],
                                        params["fpn_hr1_b"],
                                        compute_dtype=compute_dtype),
        fpn_out=prepare_conv3x3_weights(params["fpn_out_w"],
                                        params["fpn_out_b"],
                                        compute_dtype=compute_dtype),
        patch_embed=params["patch_embed"],
        dim=params["w_qkv"].shape[0],
    )


# -----------------------------------------------------------------------------
# Glue: process_tensor / fpn_fuse / forward
# -----------------------------------------------------------------------------
def process_tensor(feature_nchw, m, b):
    _, fc, fh, fw = feature_nchw.shape
    feature = feature_nchw.reshape(m, b, fc, fh, fw)
    cam = feature[0]              # .squeeze(-1) is a no-op for fw > 1
    return cam, cam


def fpn_fuse(prep, feat_nchw, hr0_nchw, hr1_nchw, out_size):
    feat = jnp.transpose(feat_nchw, (0, 2, 3, 1))
    hr0 = jnp.transpose(hr0_nchw, (0, 2, 3, 1))
    hr1 = jnp.transpose(hr1_nchw, (0, 2, 3, 1))
    b = feat.shape[0]
    # bilinear resampling matches F.interpolate(..., align_corners=False); glue.
    feat_up = jax.image.resize(
        feat, (b, hr1.shape[1], hr1.shape[2], feat.shape[3]), method="bilinear")
    merge1 = conv1x1_add(hr1, prep["fpn_hr1"], feat_up)
    merge1_up = jax.image.resize(
        merge1, (b, hr0.shape[1], hr0.shape[2], merge1.shape[3]),
        method="bilinear")
    final_merge = conv1x1_add(hr0, prep["fpn_hr0"], merge1_up)
    out = conv3x3_same(final_merge, prep["fpn_out"])
    # real module resizes to (1280, 1280); demo uses a small out_size
    out = jax.image.resize(out, (b, out_size, out_size, out.shape[3]),
                           method="bilinear")
    return jnp.transpose(out, (0, 3, 1, 2))   # back to NCHW


def lora_sam_forward(prep, batched_input, label=None, multimask_output=False,
                     *, out_size=64):
    batched_input = jnp.stack(list(batched_input), axis=0)   # [m, b, 3, h, w]
    m, b = batched_input.shape[0], batched_input.shape[1]
    h, w = batched_input.shape[3], batched_input.shape[4]
    x = batched_input.reshape(2 * b, 3, h, w)
    dim = prep["dim"]

    # ---- SAM2 image encoder with LoRA-patched qkv ---------------------------
    # TODO(synk): the SAM2 Hiera trunk / FPN neck are external modules not in
    # this file; we run the LoRA-patched qkv projection (what this module adds)
    # on a stand-in patch embedding and synthesize the rest of the pyramid.
    tok = 8
    x_small = jax.image.resize(x, (2 * b, 3, tok, tok), method="bilinear")
    tokens = (jnp.transpose(x_small, (0, 2, 3, 1)).reshape(-1, 3)
              @ prep["patch_embed"])
    qkv = lora_qkv(tokens, prep["qkv"])
    qkv = qkv.reshape(2 * b, tok, tok, 3 * dim)
    v_part = qkv[..., 2 * dim:]                                  # [2b,8,8,dim]
    feat = jnp.transpose(jnp.tile(v_part, (1, 1, 1, 256 // dim)), (0, 3, 1, 2))
    key = jax.random.PRNGKey(1234)
    k0, k1, k3 = jax.random.split(key, 3)
    hr0 = jax.random.normal(k0, (2 * b, 32, 32, 32), jnp.float32) * 0.1
    hr1 = jax.random.normal(k1, (2 * b, 64, 16, 16), jnp.float32) * 0.1

    # ---- process_tensor + FRM/FFM -------------------------------------------
    x0_cam, _ = process_tensor(hr0, m, b)
    x1_cam, _ = process_tensor(hr1, m, b)
    x_cam, _ = process_tensor(feat, m, b)
    # TODO(synk): FRM / FFM fusion modules are external (not defined in the
    # provided source); identity pass-through keeps the FPN path exercised.
    x0_fused, x1_fused, x_fused = x0_cam, x1_cam, x_cam

    # eval-mode branch of forward (self.training == False)
    prototype_loss = jnp.float32(0.0)
    kl_loss = jnp.float32(0.0)

    # ---- fpn_fuse (Pallas 1x1 / 3x3 convs) ----------------------------------
    output = fpn_fuse(prep, x_fused, x0_fused, x1_fused, out_size)

    # ---- SAM mask-decoder heads ----------------------------------------------
    # TODO(synk): sam._forward_sam_heads is an external module; a deterministic
    # placeholder with the right shape feeds the m_output averaging path.
    fmc, fmh, fmw = output.shape[1], output.shape[2], output.shape[3]
    m_output_raw = jax.random.normal(k3, (m * b, fmc, fmh, fmw), jnp.float32)
    m_output = m_output_raw.reshape(m, b, fmc, fmh, fmw).mean(axis=0)

    return m_output, output, prototype_loss, kl_loss


# -----------------------------------------------------------------------------
# Self-tests against numpy references (f32 and bf16 compute paths)
# -----------------------------------------------------------------------------
def _selftest():
    key = jax.random.PRNGKey(7)
    ks = jax.random.split(key, 12)
    tol = 5e-2

    # LoRA qkv (non-zero B so the low-rank branch is actually checked)
    d, r3, n = 32, 12, 256
    x = jax.random.normal(ks[0], (n, d), jnp.float32)
    wq = jax.random.normal(ks[1], (d, 3 * d), jnp.float32) * 0.1
    bq = jax.random.normal(ks[2], (3 * d,), jnp.float32) * 0.1
    aq = jax.random.normal(ks[3], (d, r3), jnp.float32) * 0.1
    bql = jax.random.normal(ks[4], (r3, d), jnp.float32) * 0.1
    av = jax.random.normal(ks[5], (d, r3), jnp.float32) * 0.1
    bvl = jax.random.normal(ks[6], (r3, d), jnp.float32) * 0.1
    xn = np.asarray(x)
    ref = xn @ np.asarray(wq) + np.asarray(bq)[None, :]
    ref[:, :d] += (xn @ np.asarray(aq)) @ np.asarray(bql)
    ref[:, 2 * d:] += (xn @ np.asarray(av)) @ np.asarray(bvl)
    for cd in (jnp.float32, jnp.bfloat16):
        prep = prepare_qkv_weights(wq, bq, aq, bql, av, bvl, compute_dtype=cd)
        got = np.asarray(lora_qkv(x, prep).astype(jnp.float32))
        np.testing.assert_allclose(got, ref, rtol=tol, atol=tol)

    # conv1x1 + residual add
    xc1 = jax.random.normal(ks[7], (2, 16, 16, 32), jnp.float32)
    w1 = jax.random.normal(ks[8], (32, 128), jnp.float32) * 0.1
    b1 = jax.random.normal(ks[9], (128,), jnp.float32) * 0.1
    res = jax.random.normal(ks[10], (2, 16, 16, 128), jnp.float32)
    ref1 = (np.asarray(xc1).reshape(-1, 32) @ np.asarray(w1)
            + np.asarray(b1)[None, :] + np.asarray(res).reshape(-1, 128))
    for cd in (jnp.float32, jnp.bfloat16):
        prep = prepare_conv1x1_weights(w1, b1, compute_dtype=cd)
        got1 = np.asarray(conv1x1_add(xc1, prep, res).astype(jnp.float32)
                          ).reshape(-1, 128)
        np.testing.assert_allclose(got1, ref1, rtol=tol, atol=tol)

    # conv3x3 same (Cout=5 -> padded only to 8 lanes inside the wrapper)
    xc = jax.random.normal(ks[11], (2, 16, 16, 64), jnp.float32) * 0.1
    wc = jax.random.normal(jax.random.PRNGKey(11), (3, 3, 64, 5),
                           jnp.float32) * 0.05
    bc = jnp.arange(5, dtype=jnp.float32) * 0.01
    xpn = np.pad(np.asarray(xc), ((0, 0), (1, 1), (1, 1), (0, 0)))
    refc = np.zeros((2, 16, 16, 5), np.float32)
    for dy in range(3):
        for dx in range(3):
            patch = xpn[:, dy:dy + 16, dx:dx + 16, :]
            refc += np.einsum("bhwc,co->bhwo", patch, np.asarray(wc)[dy, dx])
    refc += np.asarray(bc)[None, None, None, :]
    for cd in (jnp.float32, jnp.bfloat16):
        prep = prepare_conv3x3_weights(wc, bc, compute_dtype=cd)
        for rpt in (8, 16):   # exercises both ntr>1 (prefetch) and ntr==1 paths
            gotc = np.asarray(conv3x3_same(xc, prep, rows_per_tile=rpt))
            np.testing.assert_allclose(gotc, refc, rtol=tol, atol=tol)


if __name__ == "__main__":
    _selftest()

    params = init_lora_sam_params(jax.random.PRNGKey(0), dim=32, r=4)
    prep = prepare_inference_params(params)   # hoisted: frozen-weight prep once
    key = jax.random.PRNGKey(0)
    k1, k2 = jax.random.split(key)
    m, b, h, w = 2, 2, 64, 64
    batched_input = [
        jax.random.normal(k1, (b, 3, h, w), jnp.float32),
        jax.random.normal(k2, (b, 3, h, w), jnp.float32),
    ]
    label = jnp.zeros((b, h, w), jnp.int32)   # unused in eval mode

    m_output, output, prototype_loss, kl_loss = lora_sam_forward(
        prep, batched_input, label, multimask_output=False)
    jax.block_until_ready((m_output, output, prototype_loss, kl_loss))

    assert output.shape == (b, 5, 64, 64)
    assert m_output.shape == (b, 5, 64, 64)
    print("KERNEL_OK")
</pallas_src>

<mosaic_0001>
module attributes {stable_mosaic.version = 11 : i64} {
  func.func @_qkv_kernel(%arg0: i32, %arg1: i32, %arg2: memref<128x32xf32, #tpu.memory_space<vmem>>, %arg3: memref<32x128xf32, #tpu.memory_space<vmem>>, %arg4: memref<1x128xf32, #tpu.memory_space<vmem>>, %arg5: memref<32x24xf32, #tpu.memory_space<vmem>>, %arg6: memref<24x128xf32, #tpu.memory_space<vmem>>, %arg7: memref<128x128xf32, #tpu.memory_space<vmem>>) attributes {dimension_semantics = [#tpu.dimension_semantics<parallel>, #tpu.dimension_semantics<parallel>], iteration_bounds = array<i64: 2, 1>, scalar_prefetch = 0 : i64, scratch_operands = 0 : i64, tpu.core_type = #tpu.core_type<tc>, window_params = [{transform_indices = @transform_0, window_bounds = array<i64: 128, 32>}, {transform_indices = @transform_1, window_bounds = array<i64: 32, 128>}, {transform_indices = @transform_2, window_bounds = array<i64: 1, 128>}, {pipeline_mode = #tpu.pipeline_mode<synchronous>, transform_indices = @transform_3, window_bounds = array<i64: 32, 24>}, {transform_indices = @transform_4, window_bounds = array<i64: 24, 128>}, {transform_indices = @transform_5, window_bounds = array<i64: 128, 128>}]} {
    %c0 = arith.constant 0 : index
    %c0_0 = arith.constant 0 : index
    %0 = vector.load %arg2[%c0, %c0_0] : memref<128x32xf32, #tpu.memory_space<vmem>>, vector<128x32xf32>
    %c0_1 = arith.constant 0 : index
    %c0_2 = arith.constant 0 : index
    %1 = vector.load %arg3[%c0_1, %c0_2] : memref<32x128xf32, #tpu.memory_space<vmem>>, vector<32x128xf32>
    %cst = arith.constant dense<0.000000e+00> : vector<128x128xf32>
    %2 = tpu.matmul %0, %1, %cst {dimension_numbers = #tpu.dot_dimension_numbers<[1], [0], [0], [1], [0, 0, 1, 1], [], []>} : vector<128x32xf32>, vector<32x128xf32>, vector<128x128xf32> -> vector<128x128xf32>
    %c0_3 = arith.constant 0 : index
    %c0_4 = arith.constant 0 : index
    %3 = vector.load %arg5[%c0_3, %c0_4] : memref<32x24xf32, #tpu.memory_space<vmem>>, vector<32x24xf32>
    %cst_5 = arith.constant dense<0.000000e+00> : vector<128x24xf32>
    %4 = tpu.matmul %0, %3, %cst_5 {dimension_numbers = #tpu.dot_dimension_numbers<[1], [0], [0], [1], [0, 0, 1, 1], [], []>} : vector<128x32xf32>, vector<32x24xf32>, vector<128x24xf32> -> vector<128x24xf32>
    %c0_6 = arith.constant 0 : index
    %c0_7 = arith.constant 0 : index
    %5 = vector.load %arg6[%c0_6, %c0_7] : memref<24x128xf32, #tpu.memory_space<vmem>>, vector<24x128xf32>
    %cst_8 = arith.constant dense<0.000000e+00> : vector<128x128xf32>
    %6 = tpu.matmul %4, %5, %cst_8 {dimension_numbers = #tpu.dot_dimension_numbers<[1], [0], [0], [1], [0, 0, 1, 1], [], []>} : vector<128x24xf32>, vector<24x128xf32>, vector<128x128xf32> -> vector<128x128xf32>
    %c0_9 = arith.constant 0 : index
    %c0_10 = arith.constant 0 : index
    %7 = vector.load %arg4[%c0_9, %c0_10] : memref<1x128xf32, #tpu.memory_space<vmem>>, vector<1x128xf32>
    %8 = vector.broadcast %7 : vector<1x128xf32> to vector<128x128xf32>
    %9 = arith.addf %2, %8 : vector<128x128xf32>
    %10 = arith.addf %9, %6 : vector<128x128xf32>
    %c0_11 = arith.constant 0 : index
    %c0_12 = arith.constant 0 : index
    %11 = vector.load %arg7[%c0_11, %c0_12] : memref<128x128xf32, #tpu.memory_space<vmem>>, vector<128x128xf32>
    tpu.vector_store %arg7[%c0_11, %c0_12], %10 {strides = array<i32>} : memref<128x128xf32, #tpu.memory_space<vmem>>, vector<128x128xf32>,
    return
  }
  func.func @transform_0(%arg0: i32, %arg1: i32) -> (i32, i32) {
    %c0_i32 = arith.constant 0 : i32
    %c0_i32_0 = arith.constant 0 : i32
    return %arg0, %c0_i32 : i32, i32
  }
  func.func @transform_1(%arg0: i32, %arg1: i32) -> (i32, i32) {
    %c0_i32 = arith.constant 0 : i32
    %c0_i32_0 = arith.constant 0 : i32
    return %c0_i32, %arg1 : i32, i32
  }
  func.func @transform_2(%arg0: i32, %arg1: i32) -> (i32, i32) {
    %c0_i32 = arith.constant 0 : i32
    %c0_i32_0 = arith.constant 0 : i32
    return %c0_i32, %arg1 : i32, i32
  }
  func.func @transform_3(%arg0: i32, %arg1: i32) -> (i32, i32) {
    %c0_i32 = arith.constant 0 : i32
    %c0_i32_0 = arith.constant 0 : i32
    %c0_i32_1 = arith.constant 0 : i32
    return %c0_i32, %c0_i32_0 : i32, i32
  }
  func.func @transform_4(%arg0: i32, %arg1: i32) -> (i32, i32) {
    %c0_i32 = arith.constant 0 : i32
    %c0_i32_0 = arith.constant 0 : i32
    return %c0_i32, %arg1 : i32, i32
  }
  func.func @transform_5(%arg0: i32, %arg1: i32) -> (i32, i32) {
    %c0_i32 = arith.constant 0 : i32
    return %arg0, %arg1 : i32, i32
  }
}

</mosaic_0001>

<llo_original>
// kernel: tpu_custom_call.1
$region0: #{tpu_custom_call.1}
  #allocation0 [shape = 'u32[]', space=smem, size = 0x4, offset = 0x4, fixed_abs, tag = 'smem constant byte address 0x4 - core index']
  #allocation1 [shape = 'u32[144,128]{1,0:T(1,128)}', space=vmem, size = 0x12000, scoped, tag = 'internal scratch']
  %s0 = inlined_call_operand.vmem [shape: f32[256,32], index: 0, kind: input, shape index: {}]
  %s1 = inlined_call_operand.vmem [shape: f32[32,128], index: 1, kind: input, shape index: {}]
  %s2 = inlined_call_operand.vmem [shape: f32[1,128], index: 2, kind: input, shape index: {}]
  %s3 = inlined_call_operand.vmem [shape: f32[32,24], index: 3, kind: input, shape index: {}]
  %s4 = inlined_call_operand.vmem [shape: f32[24,128], index: 4, kind: input, shape index: {}]
  %s5 = inlined_call_operand.hbm [shape: f32[256,128], index: 5, kind: output, shape index: {}]
  %s6 = sld [smem:[#allocation0]]
  $region53: #{tpu_custom_call.1} parent=0
    _
  %s8 = ssub.s32 1, %s6
  %s9 = scalar_select 0, %s8, %s6
  $region1: #{tpu_custom_call.1} parent=0
    #allocation2 [shape = 'u8[131072]{0}', space=vmem, size = 0x20000, scoped, tag = 'output window, operand 0']
    #allocation3 [shape = 's32[2]{0}', space=sflag, size = 0x8, scoped, tag = 'scoped memory for tpu_custom_call.1']
    %10 = vsyncpa [#allocation3], 0
    %s11 = scalar_lea.sflag [#allocation3], 1
    %12 = vsyncpa %s11, 0
    loop: start=0, step=1, limit=4
    $region2: #{tpu_custom_call.1} parent=1 // loop_pre_header
      _
    $region3: #{tpu_custom_call.1} parent=1 // loop_header
      %s14 = sphi 0, %s18
      %p15 = scmp.ge.s32.totalorder %s14, 4
      %s21 = sphi 0, %s33
      %s22 = sphi 0, %s29
      %s23 = sphi 0, %s21
      %s24 = sphi 0, %s22
      %s25 = sphi 0, %s23
      %s26 = sphi 0, %s24
      %s36 = sphi 0, %s38
      %s39 = sphi 0, %s36
      %s40 = sphi 0, %s39
      %s56 = sphi 0, %s40
      %s62 = sphi 0, %s64
      %s65 = sphi 0, %s62
      %s66 = sphi 0, %s65
      %s82 = sphi 0, %s66
      %s88 = sphi 0, %s90
      %s91 = sphi 0, %s88
      %s92 = sphi 0, %s91
      %s108 = sphi 0, %s92
      %s112 = sphi 0, %s112
      %s114 = sphi 0, %s112
      %s115 = sphi 0, %s114
      %s129 = sphi 0, %s115
      %s135 = sphi 0, %s137
      %s138 = sphi 0, %s135
      %s139 = sphi 0, %s138
      %s155 = sphi 0, %s139
      %s163 = sphi 0, %s165
      %s166 = sphi 0, %s163
      %s167 = sphi 0, %s166
      %s183 = sphi 0, %s167
    $region4: #{tpu_custom_call.1} parent=1 // loop_header_branch
      %17 = sbr.rel (%p15) target = $region8
    $region5: #{tpu_custom_call.1} parent=1 // loop_body
      %s19 = ssub.s32 %s14, 1
      %s20 = ssub.s32 %s14, 2
      %s27 = sadd.s32 1, %s22
      %p28 = scmp.ge.s32.totalorder %s27, 1
      %s29 = scalar_select %p28, 0, %s27
      %s30 = sadd.s32 1, %s21
      %s31 = scalar_select %p28, %s30, %s21
      %p32 = scmp.ge.s32.totalorder %s31, 2
      %s33 = scalar_select %p32, 0, %s31
      %s34 = ssub.s32 %s21, %s33
      %p35 = scmp.eq.s32.totalorder %s34, 0
      %s37 = sadd.s32 %s36, 1
      %s38 = scalar_select %p35, %s36, %s37
      %p41 = pneg %p35
      %p42 = scmp.eq.s32.totalorder %s14, 1
      %p43 = por %p41, %p42
      %p44 = scmp.ne.s32.totalorder %s36, %s39
      %p45 = scmp.eq.s32.totalorder %s14, 0
      %p46 = por %p44, %p45
      %p47 = scmp.ne.s32.totalorder %s36, %s39
      %p48 = scmp.eq.s32.totalorder %s19, 1
      %p49 = por %p47, %p48
      %p50 = scmp.ne.s32.totalorder %s39, %s40
      %p51 = scmp.eq.s32.totalorder %s19, 0
      %p52 = por %p50, %p51
      %p53 = scmp.ne.s32.totalorder %s39, %s40
      %p54 = scmp.eq.s32.totalorder %s20, 1
      %p55 = por %p53, %p54
      %p57 = scmp.ne.s32.totalorder %s40, %s56
      %p58 = scmp.eq.s32.totalorder %s20, 0
      %p59 = por %p57, %p58
      %s60 = ssub.s32 %s22, %s29
      %p61 = scmp.eq.s32.totalorder %s60, 0
      %s63 = sadd.s32 %s62, 1
      %s64 = scalar_select %p61, %s62, %s63
      %p67 = pneg %p61
      %p68 = scmp.eq.s32.totalorder %s14, 1
      %p69 = por %p67, %p68
      %p70 = scmp.ne.s32.totalorder %s62, %s65
      %p71 = scmp.eq.s32.totalorder %s14, 0
      %p72 = por %p70, %p71
      %p73 = scmp.ne.s32.totalorder %s62, %s65
      %p74 = scmp.eq.s32.totalorder %s19, 1
      %p75 = por %p73, %p74
      %p76 = scmp.ne.s32.totalorder %s65, %s66
      %p77 = scmp.eq.s32.totalorder %s19, 0
      %p78 = por %p76, %p77
      %p79 = scmp.ne.s32.totalorder %s65, %s66
      %p80 = scmp.eq.s32.totalorder %s20, 1
      %p81 = por %p79, %p80
      %p83 = scmp.ne.s32.totalorder %s66, %s82
      %p84 = scmp.eq.s32.totalorder %s20, 0
      %p85 = por %p83, %p84
      %s86 = ssub.s32 %s22, %s29
      %p87 = scmp.eq.s32.totalorder %s86, 0
      %s89 = sadd.s32 %s88, 1
      %s90 = scalar_select %p87, %s88, %s89
      %p93 = pneg %p87
      %p94 = scmp.eq.s32.totalorder %s14, 1
      %p95 = por %p93, %p94
      %p96 = scmp.ne.s32.totalorder %s88, %s91
      %p97 = scmp.eq.s32.totalorder %s14, 0
      %p98 = por %p96, %p97
      %p99 = scmp.ne.s32.totalorder %s88, %s91
      %p100 = scmp.eq.s32.totalorder %s19, 1
      %p101 = por %p99, %p100
      %p102 = scmp.ne.s32.totalorder %s91, %s92
      %p103 = scmp.eq.s32.totalorder %s19, 0
      %p104 = por %p102, %p103
      %p105 = scmp.ne.s32.totalorder %s91, %s92
      %p106 = scmp.eq.s32.totalorder %s20, 1
      %p107 = por %p105, %p106
      %p109 = scmp.ne.s32.totalorder %s92, %s108
      %p110 = scmp.eq.s32.totalorder %s20, 0
      %p111 = por %p109, %p110
      %s113 = sadd.s32 %s112, 1
      %p116 = scmp.eq.s32.totalorder %s14, 1
      %p117 = scmp.ne.s32.totalorder %s112, %s114
      %p118 = scmp.eq.s32.totalorder %s14, 0
      %p119 = por %p117, %p118
      %p120 = scmp.ne.s32.totalorder %s112, %s114
      %p121 = scmp.eq.s32.totalorder %s19, 1
      %p122 = por %p120, %p121
      %p123 = scmp.ne.s32.totalorder %s114, %s115
      %p124 = scmp.eq.s32.totalorder %s19, 0
      %p125 = por %p123, %p124
      %p126 = scmp.ne.s32.totalorder %s114, %s115
      %p127 = scmp.eq.s32.totalorder %s20, 1
      %p128 = por %p126, %p127
      %p130 = scmp.ne.s32.totalorder %s115, %s129
      %p131 = scmp.eq.s32.totalorder %s20, 0
      %p132 = por %p130, %p131
      %s133 = ssub.s32 %s22, %s29
      %p134 = scmp.eq.s32.totalorder %s133, 0
      %s136 = sadd.s32 %s135, 1
      %s137 = scalar_select %p134, %s135, %s136
      %p140 = pneg %p134
      %p141 = scmp.eq.s32.totalorder %s14, 1
      %p142 = por %p140, %p141
      %p143 = scmp.ne.s32.totalorder %s135, %s138
      %p144 = scmp.eq.s32.totalorder %s14, 0
      %p145 = por %p143, %p144
      %p146 = scmp.ne.s32.totalorder %s135, %s138
      %p147 = scmp.eq.s32.totalorder %s19, 1
      %p148 = por %p146, %p147
      %p149 = scmp.ne.s32.totalorder %s138, %s139
      %p150 = scmp.eq.s32.totalorder %s19, 0
      %p151 = por %p149, %p150
      %p152 = scmp.ne.s32.totalorder %s138, %s139
      %p153 = scmp.eq.s32.totalorder %s20, 1
      %p154 = por %p152, %p153
      %p156 = scmp.ne.s32.totalorder %s139, %s155
      %p157 = scmp.eq.s32.totalorder %s20, 0
      %p158 = por %p156, %p157
      %s159 = ssub.s32 %s21, %s33
      %s160 = ssub.s32 %s22, %s29
      %s161 = sor.u32 %s159, %s160
      %p162 = scmp.eq.s32.totalorder %s161, 0
      %s164 = sadd.s32 %s163, 1
      %s165 = scalar_select %p162, %s163, %s164
      %p168 = pneg %p162
      %p169 = scmp.eq.s32.totalorder %s14, 1
      %p170 = por %p168, %p169
      %p171 = scmp.ne.s32.totalorder %s163, %s166
      %p172 = scmp.eq.s32.totalorder %s14, 0
      %p173 = por %p171, %p172
      %p174 = scmp.ne.s32.totalorder %s163, %s166
      %p175 = scmp.eq.s32.totalorder %s19, 1
      %p176 = por %p174, %p175
      %p177 = scmp.ne.s32.totalorder %s166, %s167
      %p178 = scmp.eq.s32.totalorder %s19, 0
      %p179 = por %p177, %p178
      %p180 = scmp.ne.s32.totalorder %s166, %s167
      %p181 = scmp.eq.s32.totalorder %s20, 1
      %p182 = por %p180, %p181
      %p184 = scmp.ne.s32.totalorder %s167, %s183
      %p185 = scmp.eq.s32.totalorder %s20, 0
      %p186 = por %p184, %p185
      %p187 = scmp.le.s32.totalorder 1, %s14
      %p188 = scmp.lt.s32.totalorder %s14, 3
      %p189 = pnand %p187, %p188
      %p190 = pneg %p189
      // Predicated region
      $region9: #{tpu_custom_call.1} parent=5 // pred_check
        _
      $region10: #{tpu_custom_call.1} parent=5 // pred_check_branch
        %192 = sbr.rel (%p189) target = $region12
      $region11: #{tpu_custom_call.1} parent=5 // pred_region
        %s193 = ssub.s32 %s14, 1
        // Predicated region
        $region13: #{tpu_custom_call.1} parent=11 // pred_check
          %p194 = pneg %p78
        $region14: #{tpu_custom_call.1} parent=11 // pred_check_branch
          %196 = sbr.rel (%p194) target = $region16
        $region15: #{tpu_custom_call.1} parent=11 // pred_region
          %p197 = scmp.lt.s32.totalorder %s24, 0
          %s198 = scalar_select %p197, %s24, 0
          %s199 = smul.addr %s198, 8
          %s200 = scalar_lea.vmem %s1, %s199
        $region16: #{tpu_custom_call.1} parent=11 // pred_fallthru
          _
        // Predicated region
        $region17: #{tpu_custom_call.1} parent=11 // pred_check
          %p201 = pneg %p104
        $region18: #{tpu_custom_call.1} parent=11 // pred_check_branch
          %203 = sbr.rel (%p201) target = $region20
        $region19: #{tpu_custom_call.1} parent=11 // pred_region
          %p204 = scmp.lt.s32.totalorder %s24, 0
          %s205 = scalar_select %p204, %s24, 0
          %s206 = scalar_lea.vmem %s2, %s205
        $region20: #{tpu_custom_call.1} parent=11 // pred_fallthru
          _
        // Predicated region
        $region21: #{tpu_custom_call.1} parent=11 // pred_check
          %p207 = pneg %p125
        $region22: #{tpu_custom_call.1} parent=11 // pred_check_branch
          %209 = sbr.rel (%p207) target = $region24
        $region23: #{tpu_custom_call.1} parent=11 // pred_region
          _
        $region24: #{tpu_custom_call.1} parent=11 // pred_fallthru
          _
        // Predicated region
        $region25: #{tpu_custom_call.1} parent=11 // pred_check
          %p210 = pneg %p151
        $region26: #{tpu_custom_call.1} parent=11 // pred_check_branch
          %212 = sbr.rel (%p210) target = $region28
        $region27: #{tpu_custom_call.1} parent=11 // pred_region
          %p213 = scmp.lt.s32.totalorder %s24, 0
          %s214 = scalar_select %p213, %s24, 0
          %s215 = smul.addr %s214, 8
          %s216 = scalar_lea.vmem %s4, %s215
        $region28: #{tpu_custom_call.1} parent=11 // pred_fallthru
          _
      $region12: #{tpu_custom_call.1} parent=5 // pred_fallthru
        _
      %p217 = scmp.lt.s32.totalorder %s14, 2
      // Predicated region
      $region29: #{tpu_custom_call.1} parent=5 // pred_check
        %p218 = pneg %p217
      $region30: #{tpu_custom_call.1} parent=5 // pred_check_branch
        %220 = sbr.rel (%p218) target = $region32
      $region31: #{tpu_custom_call.1} parent=5 // pred_region
        // Predicated region
        $region33: #{tpu_custom_call.1} parent=31 // pred_check
          %p221 = pneg %p46
        $region34: #{tpu_custom_call.1} parent=31 // pred_check_branch
          %223 = sbr.rel (%p221) target = $region36
        $region35: #{tpu_custom_call.1} parent=31 // pred_region
          %s224 = smul.u32 16, %s21
          %p225 = scmp.lt.s32.totalorder %s224, 31
          %s226 = scalar_select %p225, %s224, 31
          %s227 = smul.addr %s226, 8
          %s228 = scalar_lea.vmem %s0, %s227
          %s229 = smul.u32 16, %s21
        $region36: #{tpu_custom_call.1} parent=31 // pred_fallthru
          _
      $region32: #{tpu_custom_call.1} parent=5 // pred_fallthru
        _
      %p230 = scmp.le.s32.totalorder 1, %s14
      %p231 = scmp.lt.s32.totalorder %s14, 3
      %p232 = pnand %p230, %p231
      %p233 = pneg %p232
      // Predicated region
      $region37: #{tpu_custom_call.1} parent=5 // pred_check
        _
      $region38: #{tpu_custom_call.1} parent=5 // pred_check_branch
        %235 = sbr.rel (%p232) target = $region40
      $region39: #{tpu_custom_call.1} parent=5 // pred_region
        %s236 = ssub.s32 %s14, 1
        %s237 = smul.u32 16, %s23
        %p238 = scmp.lt.s32.totalorder %s237, 31
        %s239 = scalar_select %p238, %s237, 31
        %s240 = smul.addr %s239, 8
        %s241 = scalar_lea.vmem %s0, %s240
        %p242 = pneg %p52
        %p243 = pneg %p49
        %p244 = scmp.lt.s32.totalorder %s24, 0
        %s245 = scalar_select %p244, %s24, 0
        %s246 = smul.addr %s245, 8
        %s247 = scalar_lea.vmem %s1, %s246
        %p248 = pneg %p78
        %p249 = pneg %p75
        %p250 = scmp.lt.s32.totalorder %s24, 0
        %s251 = scalar_select %p250, %s24, 0
        %s252 = scalar_lea.vmem %s2, %s251
        %p253 = pneg %p104
        %p254 = pneg %p101
        %p255 = pneg %p125
        %p256 = pneg %p122
        %p257 = scmp.lt.s32.totalorder %s24, 0
        %s258 = scalar_select %p257, %s24, 0
        %s259 = smul.addr %s258, 8
        %s260 = scalar_lea.vmem %s4, %s259
        %p261 = pneg %p151
        %p262 = pneg %p148
        %p263 = pneg %p179
        %p264 = pneg %p176
        %s265 = sand.u32 %s166, 1
        %s266 = scalar_lea.sflag [#allocation3], %s265
        %s267 = sand.u32 %s166, 1
        %s268 = smul.addr %s267, 128
        %s269 = scalar_lea.vmem [#allocation2], %s268
        %s270 = smul.u32 16, %s23
        %p271 = scmp.lt.s32.totalorder %s270, 31
        %s272 = scalar_select %p271, %s270, 31
        %s273 = smul.addr %s272, 8
        %s274 = scalar_lea.vmem %s0, %s273
        %s275 = smul.u32 16, %s23
        %p276 = scmp.lt.s32.totalorder %s24, 0
        %s277 = scalar_select %p276, %s24, 0
        %s278 = smul.addr %s277, 8
        %s279 = scalar_lea.vmem %s1, %s278
        %p280 = scmp.lt.s32.totalorder %s24, 0
        %s281 = scalar_select %p280, %s24, 0
        %s282 = scalar_lea.vmem %s2, %s281
        %p283 = scmp.lt.s32.totalorder %s24, 0
        %s284 = scalar_select %p283, %s24, 0
        %s285 = smul.addr %s284, 8
        %s286 = scalar_lea.vmem %s4, %s285
        %s287 = smul.u32 16, %s23
        %v288 = vld [vmem:[%s274] sm:$0xff]
        %v289 = vld [vmem:[%s274 + $0x8] sm:$0xff]
        %v290 = vld [vmem:[%s274 + $0x10] sm:$0xff]
        %v291 = vld [vmem:[%s274 + $0x18] sm:$0xff]
        %v292 = vld [vmem:[%s274 + $0x20] sm:$0xff]
        %v293 = vld [vmem:[%s274 + $0x28] sm:$0xff]
        %v294 = vld [vmem:[%s274 + $0x30] sm:$0xff]
        %v295 = vld [vmem:[%s274 + $0x38] sm:$0xff]
        %v296 = vld [vmem:[%s274 + $0x40] sm:$0xff]
        %v297 = vld [vmem:[%s274 + $0x48] sm:$0xff]
        %v298 = vld [vmem:[%s274 + $0x50] sm:$0xff]
        %v299 = vld [vmem:[%s274 + $0x58] sm:$0xff]
        %v300 = vld [vmem:[%s274 + $0x60] sm:$0xff]
        %v301 = vld [vmem:[%s274 + $0x68] sm:$0xff]
        %v302 = vld [vmem:[%s274 + $0x70] sm:$0xff]
        %v303 = vld [vmem:[%s274 + $0x78] sm:$0xff]
        %v304 = vld [vmem:[%s279] sm:$0xff]
        %v305 = vld [vmem:[%s279 + $0x8] sm:$0xff]
        %v306 = vld [vmem:[%s279 + $0x10] sm:$0xff]
        %v307 = vld [vmem:[%s279 + $0x18] sm:$0xff]
        %v308 = vld [vmem:[%s3] sm:$0xff]
        %v309 = vld [vmem:[%s3 + $0x8] sm:$0xff]
        %v310 = vld [vmem:[%s3 + $0x10] sm:$0xff]
        %v311 = vld [vmem:[%s3 + $0x18] sm:$0xff]
        %vm312 = vcmask 261120
        %v314 = vsel %vm312, %v288, 0
        %v317 = vsel %vm312, %v289, 0
        %v320 = vsel %vm312, %v290, 0
        %v323 = vsel %vm312, %v291, 0
        %v326 = vsel %vm312, %v292, 0
        %v329 = vsel %vm312, %v293, 0
        %v332 = vsel %vm312, %v294, 0
        %v335 = vsel %vm312, %v295, 0
        %v338 = vsel %vm312, %v296, 0
        %v341 = vsel %vm312, %v297, 0
        %v344 = vsel %vm312, %v298, 0
        %v347 = vsel %vm312, %v299, 0
        %v350 = vsel %vm312, %v300, 0
        %v353 = vsel %vm312, %v301, 0
        %v356 = vsel %vm312, %v302, 0
        %v359 = vsel %vm312, %v303, 0
        %361 = vmatprep.subr.mxu0 0.0
        %362 = vmatpush1.msra.mxu0 0.0
        %363 = vmatprep.subr.mxu0 0.0
        %364 = vmatpush1.msra.mxu0 0.0
        %365 = vmatprep.subr.mxu0 0.0
        %366 = vmatpush1.msra.mxu0 0.0
        %367 = vmatprep.subr.mxu0 0.0
        %368 = vmatpush1.msra.mxu0 0.0
        %369 = vmatprep.subr.mxu0 0.0
        %370 = vmatpush1.msra.mxu0 0.0
        %371 = vmatprep.subr.mxu0 0.0
        %372 = vmatpush1.msra.mxu0 0.0
        %373 = vmatprep.subr.mxu0 0.0
        %374 = vmatpush1.msra.mxu0 0.0
        %375 = vmatprep.subr.mxu0 0.0
        %376 = vmatpush1.msra.mxu0 0.0
        %377 = vmatprep.subr.mxu0 0.0
        %378 = vmatpush1.msra.mxu0 0.0
        %379 = vmatprep.subr.mxu0 0.0
        %380 = vmatpush1.msra.mxu0 0.0
        %381 = vmatprep.subr.mxu0 0.0
        %382 = vmatpush1.msra.mxu0 0.0
        %383 = vmatprep.subr.mxu0 0.0
        %384 = vmatpush1.msra.mxu0 0.0
        %385 = vmatprep.subr.mxu0 0.0
        %386 = vmatpush1.msra.mxu0 %v311
        %387 = vmatprep.subr.mxu0 0.0
        %388 = vmatpush1.msra.mxu0 %v310
        %389 = vmatprep.subr.mxu0 0.0
        %390 = vmatpush1.msra.mxu0 %v309
        %391 = vmatprep.subr.mxu0 0.0
        %392 = vmatpush1.msra.mxu0 %v308
        %393 = vmatprep.subr.mxu0 0.0
        %394 = vmatpush2.msra.mxu0 0.0
        %395 = vmatprep.subr.mxu0 0.0
        %396 = vmatpush2.msra.mxu0 0.0
        %397 = vmatprep.subr.mxu0 0.0
        %398 = vmatpush2.msra.mxu0 0.0
        %399 = vmatprep.subr.mxu0 0.0
        %400 = vmatpush2.msra.mxu0 0.0
        %401 = vmatprep.subr.mxu0 0.0
        %402 = vmatpush2.msra.mxu0 0.0
        %403 = vmatprep.subr.mxu0 0.0
        %404 = vmatpush2.msra.mxu0 0.0
        %405 = vmatprep.subr.mxu0 0.0
        %406 = vmatpush2.msra.mxu0 0.0
        %407 = vmatprep.subr.mxu0 0.0
        %408 = vmatpush2.msra.mxu0 0.0
        %409 = vmatprep.subr.mxu0 0.0
        %410 = vmatpush2.msra.mxu0 0.0
        %411 = vmatprep.subr.mxu0 0.0
        %412 = vmatpush2.msra.mxu0 0.0
        %413 = vmatprep.subr.mxu0 0.0
        %414 = vmatpush2.msra.mxu0 0.0
        %415 = vmatprep.subr.mxu0 0.0
        %416 = vmatpush2.msra.mxu0 0.0
        %417 = vmatprep.subr.mxu0 0.0
        %418 = vmatpush2.msra.mxu0 0.0
        %419 = vmatprep.subr.mxu0 0.0
        %420 = vmatpush2.msra.mxu0 0.0
        %421 = vmatprep.subr.mxu0 0.0
        %422 = vmatpush2.msra.mxu0 0.0
        %423 = vmatprep.subr.mxu0 0.0
        %424 = vmatpush2.msra.mxu0 0.0
        %425 = vmatprep.mubr.f32.mxu0 0.0
        %426 = vmatmul.mubr.f32.gmra.mxu0 %v314
        %v427 = vpop.f32.mrf.mxu0
        %v428 = vadd.f32 0.0, %v427
        %v429 = vpop.f32.mrf.mxu0
        %430 = vmatprep.mubr.f32.mxu0 0.0
        %431 = vmatmul.mubr.f32.gmra.mxu0 %v317
        %v432 = vpop.f32.mrf.mxu0
        %v433 = vadd.f32 0.0, %v432
        %v434 = vpop.f32.mrf.mxu0
        %435 = vmatprep.mubr.f32.mxu0 0.0
        %436 = vmatmul.mubr.f32.gmra.mxu0 %v320
        %v437 = vpop.f32.mrf.mxu0
        %v438 = vadd.f32 0.0, %v437
        %v439 = vpop.f32.mrf.mxu0
        %440 = vmatprep.mubr.f32.mxu0 0.0
        %441 = vmatmul.mubr.f32.gmra.mxu0 %v323
        %v442 = vpop.f32.mrf.mxu0
        %v443 = vadd.f32 0.0, %v442
        %v444 = vpop.f32.mrf.mxu0
        %445 = vmatprep.mubr.f32.mxu0 0.0
        %446 = vmatmul.mubr.f32.gmra.mxu0 %v326
        %v447 = vpop.f32.mrf.mxu0
        %v448 = vadd.f32 0.0, %v447
        %v449 = vpop.f32.mrf.mxu0
        %450 = vmatprep.mubr.f32.mxu0 0.0
        %451 = vmatmul.mubr.f32.gmra.mxu0 %v329
        %v452 = vpop.f32.mrf.mxu0
        %v453 = vadd.f32 0.0, %v452
        %v454 = vpop.f32.mrf.mxu0
        %455 = vmatprep.mubr.f32.mxu0 0.0
        %456 = vmatmul.mubr.f32.gmra.mxu0 %v332
        %v457 = vpop.f32.mrf.mxu0
        %v458 = vadd.f32 0.0, %v457
        %v459 = vpop.f32.mrf.mxu0
        %460 = vmatprep.mubr.f32.mxu0 0.0
        %461 = vmatmul.mubr.f32.gmra.mxu0 %v335
        %v462 = vpop.f32.mrf.mxu0
        %v463 = vadd.f32 0.0, %v462
        %v464 = vpop.f32.mrf.mxu0
        %465 = vmatprep.mubr.f32.mxu0 0.0
        %466 = vmatmul.mubr.f32.gmra.mxu0 %v338
        %v467 = vpop.f32.mrf.mxu0
        %v468 = vadd.f32 0.0, %v467
        %v469 = vpop.f32.mrf.mxu0
        %470 = vmatprep.mubr.f32.mxu0 0.0
        %471 = vmatmul.mubr.f32.gmra.mxu0 %v341
        %v472 = vpop.f32.mrf.mxu0
        %v473 = vadd.f32 0.0, %v472
        %v474 = vpop.f32.mrf.mxu0
        %475 = vmatprep.mubr.f32.mxu0 0.0
        %476 = vmatmul.mubr.f32.gmra.mxu0 %v344
        %v477 = vpop.f32.mrf.mxu0
        %v478 = vadd.f32 0.0, %v477
        %v479 = vpop.f32.mrf.mxu0
        %480 = vmatprep.mubr.f32.mxu0 0.0
        %481 = vmatmul.mubr.f32.gmra.mxu0 %v347
        %v482 = vpop.f32.mrf.mxu0
        %v483 = vadd.f32 0.0, %v482
        %v484 = vpop.f32.mrf.mxu0
        %485 = vmatprep.mubr.f32.mxu0 0.0
        %486 = vmatmul.mubr.f32.gmra.mxu0 %v350
        %v487 = vpop.f32.mrf.mxu0
        %v488 = vadd.f32 0.0, %v487
        %v489 = vpop.f32.mrf.mxu0
        %490 = vmatprep.mubr.f32.mxu0 0.0
        %491 = vmatmul.mubr.f32.gmra.mxu0 %v353
        %v492 = vpop.f32.mrf.mxu0
        %v493 = vadd.f32 0.0, %v492
        %v494 = vpop.f32.mrf.mxu0
        %495 = vmatprep.mubr.f32.mxu0 0.0
        %496 = vmatmul.mubr.f32.gmra.mxu0 %v356
        %v497 = vpop.f32.mrf.mxu0
        %v498 = vadd.f32 0.0, %v497
        %v499 = vpop.f32.mrf.mxu0
        %500 = vmatprep.mubr.f32.mxu0 0.0
        %501 = vmatmul.mubr.f32.gmra.mxu0 %v359
        %v502 = vpop.f32.mrf.mxu0
        %v503 = vadd.f32 0.0, %v502
        %v504 = vpop.f32.mrf.mxu0
        %505 = vdwg.mxu0
        %v506 = vld [vmem:[%s286] sm:$0xff]
        %v507 = vld [vmem:[%s286 + $0x8] sm:$0xff]
        %v508 = vld [vmem:[%s286 + $0x10] sm:$0xff]
        %vm509 = vcmask 195584
        %v511 = vsel %vm509, %v428, 0
        %v514 = vsel %vm509, %v433, 0
        %v517 = vsel %vm509, %v438, 0
        %v520 = vsel %vm509, %v443, 0
        %v523 = vsel %vm509, %v448, 0
        %v526 = vsel %vm509, %v453, 0
        %v529 = vsel %vm509, %v458, 0
        %v532 = vsel %vm509, %v463, 0
        %v535 = vsel %vm509, %v468, 0
        %v538 = vsel %vm509, %v473, 0
        %v541 = vsel %vm509, %v478, 0
        %v544 = vsel %vm509, %v483, 0
        %v547 = vsel %vm509, %v488, 0
        %v550 = vsel %vm509, %v493, 0
        %v553 = vsel %vm509, %v498, 0
        %v556 = vsel %vm509, %v503, 0
        %558 = vmatprep.subr.mxu0 0.0
        %559 = vmatpush1.msra.mxu0 0.0
        %560 = vmatprep.subr.mxu0 0.0
        %561 = vmatpush1.msra.mxu0 0.0
        %562 = vmatprep.subr.mxu0 0.0
        %563 = vmatpush1.msra.mxu0 0.0
        %564 = vmatprep.subr.mxu0 0.0
        %565 = vmatpush1.msra.mxu0 0.0
        %566 = vmatprep.subr.mxu0 0.0
        %567 = vmatpush1.msra.mxu0 0.0
        %568 = vmatprep.subr.mxu0 0.0
        %569 = vmatpush1.msra.mxu0 0.0
        %570 = vmatprep.subr.mxu0 0.0
        %571 = vmatpush1.msra.mxu0 0.0
        %572 = vmatprep.subr.mxu0 0.0
        %573 = vmatpush1.msra.mxu0 0.0
        %574 = vmatprep.subr.mxu0 0.0
        %575 = vmatpush1.msra.mxu0 0.0
        %576 = vmatprep.subr.mxu0 0.0
        %577 = vmatpush1.msra.mxu0 0.0
        %578 = vmatprep.subr.mxu0 0.0
        %579 = vmatpush1.msra.mxu0 0.0
        %580 = vmatprep.subr.mxu0 0.0
        %581 = vmatpush1.msra.mxu0 0.0
        %582 = vmatprep.subr.mxu0 0.0
        %583 = vmatpush1.msra.mxu0 0.0
        %584 = vmatprep.subr.mxu0 0.0
        %585 = vmatpush1.msra.mxu0 %v508
        %586 = vmatprep.subr.mxu0 0.0
        %587 = vmatpush1.msra.mxu0 %v507
        %588 = vmatprep.subr.mxu0 0.0
        %589 = vmatpush1.msra.mxu0 %v506
        %590 = vmatprep.subr.mxu0 0.0
        %591 = vmatpush2.msra.mxu0 0.0
        %592 = vmatprep.subr.mxu0 0.0
        %593 = vmatpush2.msra.mxu0 0.0
        %594 = vmatprep.subr.mxu0 0.0
        %595 = vmatpush2.msra.mxu0 0.0
        %596 = vmatprep.subr.mxu0 0.0
        %597 = vmatpush2.msra.mxu0 0.0
        %598 = vmatprep.subr.mxu0 0.0
        %599 = vmatpush2.msra.mxu0 0.0
        %600 = vmatprep.subr.mxu0 0.0
        %601 = vmatpush2.msra.mxu0 0.0
        %602 = vmatprep.subr.mxu0 0.0
        %603 = vmatpush2.msra.mxu0 0.0
        %604 = vmatprep.subr.mxu0 0.0
        %605 = vmatpush2.msra.mxu0 0.0
        %606 = vmatprep.subr.mxu0 0.0
        %607 = vmatpush2.msra.mxu0 0.0
        %608 = vmatprep.subr.mxu0 0.0
        %609 = vmatpush2.msra.mxu0 0.0
        %610 = vmatprep.subr.mxu0 0.0
        %611 = vmatpush2.msra.mxu0 0.0
        %612 = vmatprep.subr.mxu0 0.0
        %613 = vmatpush2.msra.mxu0 0.0
        %614 = vmatprep.subr.mxu0 0.0
        %615 = vmatpush2.msra.mxu0 0.0
        %616 = vmatprep.subr.mxu0 0.0
        %617 = vmatpush2.msra.mxu0 0.0
        %618 = vmatprep.subr.mxu0 0.0
        %619 = vmatpush2.msra.mxu0 0.0
        %620 = vmatprep.subr.mxu0 0.0
        %621 = vmatpush2.msra.mxu0 0.0
        %622 = vmatprep.mubr.f32.mxu0 0.0
        %623 = vmatmul.mubr.f32.gmra.mxu0 %v511
        %v624 = vpop.f32.mrf.mxu0
        %v625 = vadd.f32 0.0, %v624
        %v626 = vpop.f32.mrf.mxu0
        %627 = vmatprep.mubr.f32.mxu0 0.0
        %628 = vmatmul.mubr.f32.gmra.mxu0 %v514
        %v629 = vpop.f32.mrf.mxu0
        %v630 = vadd.f32 0.0, %v629
        %v631 = vpop.f32.mrf.mxu0
        %632 = vmatprep.mubr.f32.mxu0 0.0
        %633 = vmatmul.mubr.f32.gmra.mxu0 %v517
        %v634 = vpop.f32.mrf.mxu0
        %v635 = vadd.f32 0.0, %v634
        %v636 = vpop.f32.mrf.mxu0
        %637 = vmatprep.mubr.f32.mxu0 0.0
        %638 = vmatmul.mubr.f32.gmra.mxu0 %v520
        %v639 = vpop.f32.mrf.mxu0
        %v640 = vadd.f32 0.0, %v639
        %v641 = vpop.f32.mrf.mxu0
        %642 = vmatprep.mubr.f32.mxu0 0.0
        %643 = vmatmul.mubr.f32.gmra.mxu0 %v523
        %v644 = vpop.f32.mrf.mxu0
        %v645 = vadd.f32 0.0, %v644
        %v646 = vpop.f32.mrf.mxu0
        %647 = vmatprep.mubr.f32.mxu0 0.0
        %648 = vmatmul.mubr.f32.gmra.mxu0 %v526
        %v649 = vpop.f32.mrf.mxu0
        %v650 = vadd.f32 0.0, %v649
        %v651 = vpop.f32.mrf.mxu0
        %652 = vmatprep.mubr.f32.mxu0 0.0
        %653 = vmatmul.mubr.f32.gmra.mxu0 %v529
        %v654 = vpop.f32.mrf.mxu0
        %v655 = vadd.f32 0.0, %v654
        %v656 = vpop.f32.mrf.mxu0
        %657 = vmatprep.mubr.f32.mxu0 0.0
        %658 = vmatmul.mubr.f32.gmra.mxu0 %v532
        %v659 = vpop.f32.mrf.mxu0
        %v660 = vadd.f32 0.0, %v659
        %v661 = vpop.f32.mrf.mxu0
        %662 = vmatprep.mubr.f32.mxu0 0.0
        %663 = vmatmul.mubr.f32.gmra.mxu0 %v535
        %v664 = vpop.f32.mrf.mxu0
        %v665 = vadd.f32 0.0, %v664
        %v666 = vpop.f32.mrf.mxu0
        %667 = vmatprep.mubr.f32.mxu0 0.0
        %668 = vmatmul.mubr.f32.gmra.mxu0 %v538
        %v669 = vpop.f32.mrf.mxu0
        %v670 = vadd.f32 0.0, %v669
        %v671 = vpop.f32.mrf.mxu0
        %672 = vmatprep.mubr.f32.mxu0 0.0
        %673 = vmatmul.mubr.f32.gmra.mxu0 %v541
        %v674 = vpop.f32.mrf.mxu0
        %v675 = vadd.f32 0.0, %v674
        %v676 = vpop.f32.mrf.mxu0
        %677 = vmatprep.mubr.f32.mxu0 0.0
        %678 = vmatmul.mubr.f32.gmra.mxu0 %v544
        %v679 = vpop.f32.mrf.mxu0
        %v680 = vadd.f32 0.0, %v679
        %v681 = vpop.f32.mrf.mxu0
        %682 = vmatprep.mubr.f32.mxu0 0.0
        %683 = vmatmul.mubr.f32.gmra.mxu0 %v547
        %v684 = vpop.f32.mrf.mxu0
        %v685 = vadd.f32 0.0, %v684
        %v686 = vpop.f32.mrf.mxu0
        %687 = vmatprep.mubr.f32.mxu0 0.0
        %688 = vmatmul.mubr.f32.gmra.mxu0 %v550
        %v689 = vpop.f32.mrf.mxu0
        %v690 = vadd.f32 0.0, %v689
        %v691 = vpop.f32.mrf.mxu0
        %692 = vmatprep.mubr.f32.mxu0 0.0
        %693 = vmatmul.mubr.f32.gmra.mxu0 %v553
        %v694 = vpop.f32.mrf.mxu0
        %v695 = vadd.f32 0.0, %v694
        %v696 = vpop.f32.mrf.mxu0
        %697 = vmatprep.mubr.f32.mxu0 0.0
        %698 = vmatmul.mubr.f32.gmra.mxu0 %v556
        %v699 = vpop.f32.mrf.mxu0
        %v700 = vadd.f32 0.0, %v699
        %v701 = vpop.f32.mrf.mxu0
        %702 = vdwg.mxu0
        %v703 = vld [vmem:[%s282] sm:$0x1]
        %v705 = vlaneseq
        %v706 = vshrl.u32 %v705, 7
        %v707 = vsub.s32 0, %v706
        %v708 = vrot.slane %v703, %v707
        %710 = vmatprep.subr.mxu0 0.0
        %711 = vmatpush1.msra.mxu0 0.0
        %712 = vmatprep.subr.mxu0 0.0
        %713 = vmatpush1.msra.mxu0 0.0
        %714 = vmatprep.subr.mxu0 0.0
        %715 = vmatpush1.msra.mxu0 0.0
        %716 = vmatprep.subr.mxu0 0.0
        %717 = vmatpush1.msra.mxu0 0.0
        %718 = vmatprep.subr.mxu0 0.0
        %719 = vmatpush1.msra.mxu0 0.0
        %720 = vmatprep.subr.mxu0 0.0
        %721 = vmatpush1.msra.mxu0 0.0
        %722 = vmatprep.subr.mxu0 0.0
        %723 = vmatpush1.msra.mxu0 0.0
        %724 = vmatprep.subr.mxu0 0.0
        %725 = vmatpush1.msra.mxu0 0.0
        %726 = vmatprep.subr.mxu0 0.0
        %727 = vmatpush1.msra.mxu0 0.0
        %728 = vmatprep.subr.mxu0 0.0
        %729 = vmatpush1.msra.mxu0 0.0
        %730 = vmatprep.subr.mxu0 0.0
        %731 = vmatpush1.msra.mxu0 0.0
        %732 = vmatprep.subr.mxu0 0.0
        %733 = vmatpush1.msra.mxu0 0.0
        %734 = vmatprep.subr.mxu0 0.0
        %735 = vmatpush1.msra.mxu0 %v307
        %736 = vmatprep.subr.mxu0 0.0
        %737 = vmatpush1.msra.mxu0 %v306
        %738 = vmatprep.subr.mxu0 0.0
        %739 = vmatpush1.msra.mxu0 %v305
        %740 = vmatprep.subr.mxu0 0.0
        %741 = vmatpush1.msra.mxu0 %v304
        %742 = vmatprep.subr.mxu0 0.0
        %743 = vmatpush2.msra.mxu0 0.0
        %744 = vmatprep.subr.mxu0 0.0
        %745 = vmatpush2.msra.mxu0 0.0
        %746 = vmatprep.subr.mxu0 0.0
        %747 = vmatpush2.msra.mxu0 0.0
        %748 = vmatprep.subr.mxu0 0.0
        %749 = vmatpush2.msra.mxu0 0.0
        %750 = vmatprep.subr.mxu0 0.0
        %751 = vmatpush2.msra.mxu0 0.0
        %752 = vmatprep.subr.mxu0 0.0
        %753 = vmatpush2.msra.mxu0 0.0
        %754 = vmatprep.subr.mxu0 0.0
        %755 = vmatpush2.msra.mxu0 0.0
        %756 = vmatprep.subr.mxu0 0.0
        %757 = vmatpush2.msra.mxu0 0.0
        %758 = vmatprep.subr.mxu0 0.0
        %759 = vmatpush2.msra.mxu0 0.0
        %760 = vmatprep.subr.mxu0 0.0
        %761 = vmatpush2.msra.mxu0 0.0
        %762 = vmatprep.subr.mxu0 0.0
        %763 = vmatpush2.msra.mxu0 0.0
        %764 = vmatprep.subr.mxu0 0.0
        %765 = vmatpush2.msra.mxu0 0.0
        %766 = vmatprep.subr.mxu0 0.0
        %767 = vmatpush2.msra.mxu0 0.0
        %768 = vmatprep.subr.mxu0 0.0
        %769 = vmatpush2.msra.mxu0 0.0
        %770 = vmatprep.subr.mxu0 0.0
        %771 = vmatpush2.msra.mxu0 0.0
        %772 = vmatprep.subr.mxu0 0.0
        %773 = vmatpush2.msra.mxu0 0.0
        %774 = vmatprep.mubr.f32.mxu0 0.0
        %775 = vmatmul.mubr.f32.gmra.mxu0 %v314
        %v776 = vpop.f32.mrf.mxu0
        %v777 = vadd.f32 %v708, %v776
        %v778 = vpop.f32.mrf.mxu0
        %779 = vmatprep.mubr.f32.mxu0 0.0
        %780 = vmatmul.mubr.f32.gmra.mxu0 %v317
        %v781 = vpop.f32.mrf.mxu0
        %v782 = vadd.f32 %v708, %v781
        %v783 = vpop.f32.mrf.mxu0
        %784 = vmatprep.mubr.f32.mxu0 0.0
        %785 = vmatmul.mubr.f32.gmra.mxu0 %v320
        %v786 = vpop.f32.mrf.mxu0
        %v787 = vadd.f32 %v708, %v786
        %v788 = vpop.f32.mrf.mxu0
        %789 = vmatprep.mubr.f32.mxu0 0.0
        %790 = vmatmul.mubr.f32.gmra.mxu0 %v323
        %v791 = vpop.f32.mrf.mxu0
        %v792 = vadd.f32 %v708, %v791
        %v793 = vpop.f32.mrf.mxu0
        %794 = vmatprep.mubr.f32.mxu0 0.0
        %795 = vmatmul.mubr.f32.gmra.mxu0 %v326
        %v796 = vpop.f32.mrf.mxu0
        %v797 = vadd.f32 %v708, %v796
        %v798 = vpop.f32.mrf.mxu0
        %799 = vmatprep.mubr.f32.mxu0 0.0
        %800 = vmatmul.mubr.f32.gmra.mxu0 %v329
        %v801 = vpop.f32.mrf.mxu0
        %v802 = vadd.f32 %v708, %v801
        %v803 = vpop.f32.mrf.mxu0
        %804 = vmatprep.mubr.f32.mxu0 0.0
        %805 = vmatmul.mubr.f32.gmra.mxu0 %v332
        %v806 = vpop.f32.mrf.mxu0
        %v807 = vadd.f32 %v708, %v806
        %v808 = vpop.f32.mrf.mxu0
        %809 = vmatprep.mubr.f32.mxu0 0.0
        %810 = vmatmul.mubr.f32.gmra.mxu0 %v335
        %v811 = vpop.f32.mrf.mxu0
        %v812 = vadd.f32 %v708, %v811
        %v813 = vpop.f32.mrf.mxu0
        %814 = vmatprep.mubr.f32.mxu0 0.0
        %815 = vmatmul.mubr.f32.gmra.mxu0 %v338
        %v816 = vpop.f32.mrf.mxu0
        %v817 = vadd.f32 %v708, %v816
        %v818 = vpop.f32.mrf.mxu0
        %819 = vmatprep.mubr.f32.mxu0 0.0
        %820 = vmatmul.mubr.f32.gmra.mxu0 %v341
        %v821 = vpop.f32.mrf.mxu0
        %v822 = vadd.f32 %v708, %v821
        %v823 = vpop.f32.mrf.mxu0
        %824 = vmatprep.mubr.f32.mxu0 0.0
        %825 = vmatmul.mubr.f32.gmra.mxu0 %v344
        %v826 = vpop.f32.mrf.mxu0
        %v827 = vadd.f32 %v708, %v826
        %v828 = vpop.f32.mrf.mxu0
        %829 = vmatprep.mubr.f32.mxu0 0.0
        %830 = vmatmul.mubr.f32.gmra.mxu0 %v347
        %v831 = vpop.f32.mrf.mxu0
        %v832 = vadd.f32 %v708, %v831
        %v833 = vpop.f32.mrf.mxu0
        %834 = vmatprep.mubr.f32.mxu0 0.0
        %835 = vmatmul.mubr.f32.gmra.mxu0 %v350
        %v836 = vpop.f32.mrf.mxu0
        %v837 = vadd.f32 %v708, %v836
        %v838 = vpop.f32.mrf.mxu0
        %839 = vmatprep.mubr.f32.mxu0 0.0
        %840 = vmatmul.mubr.f32.gmra.mxu0 %v353
        %v841 = vpop.f32.mrf.mxu0
        %v842 = vadd.f32 %v708, %v841
        %v843 = vpop.f32.mrf.mxu0
        %844 = vmatprep.mubr.f32.mxu0 0.0
        %845 = vmatmul.mubr.f32.gmra.mxu0 %v356
        %v846 = vpop.f32.mrf.mxu0
        %v847 = vadd.f32 %v708, %v846
        %v848 = vpop.f32.mrf.mxu0
        %849 = vmatprep.mubr.f32.mxu0 0.0
        %850 = vmatmul.mubr.f32.gmra.mxu0 %v359
        %v851 = vpop.f32.mrf.mxu0
        %v852 = vadd.f32 %v708, %v851
        %v853 = vpop.f32.mrf.mxu0
        %854 = vdwg.mxu0
        %v855 = vadd.f32 %v777, %v625
        %v856 = vadd.f32 %v782, %v630
        %v857 = vadd.f32 %v787, %v635
        %v858 = vadd.f32 %v792, %v640
        %v859 = vadd.f32 %v797, %v645
        %v860 = vadd.f32 %v802, %v650
        %v861 = vadd.f32 %v807, %v655
        %v862 = vadd.f32 %v812, %v660
        %v863 = vadd.f32 %v817, %v665
        %v864 = vadd.f32 %v822, %v670
        %v865 = vadd.f32 %v827, %v675
        %v866 = vadd.f32 %v832, %v680
        %v867 = vadd.f32 %v837, %v685
        %v868 = vadd.f32 %v842, %v690
        %v869 = vadd.f32 %v847, %v695
        %v870 = vadd.f32 %v852, %v700
        %871 = vst [vmem:[%s269] sm:$0xff] %v855
        %872 = vst [vmem:[%s269 + $0x8] sm:$0xff] %v856
        %873 = vst [vmem:[%s269 + $0x10] sm:$0xff] %v857
        %874 = vst [vmem:[%s269 + $0x18] sm:$0xff] %v858
        %875 = vst [vmem:[%s269 + $0x20] sm:$0xff] %v859
        %876 = vst [vmem:[%s269 + $0x28] sm:$0xff] %v860
        %877 = vst [vmem:[%s269 + $0x30] sm:$0xff] %v861
        %878 = vst [vmem:[%s269 + $0x38] sm:$0xff] %v862
        %879 = vst [vmem:[%s269 + $0x40] sm:$0xff] %v863
        %880 = vst [vmem:[%s269 + $0x48] sm:$0xff] %v864
        %881 = vst [vmem:[%s269 + $0x50] sm:$0xff] %v865
        %882 = vst [vmem:[%s269 + $0x58] sm:$0xff] %v866
        %883 = vst [vmem:[%s269 + $0x60] sm:$0xff] %v867
        %884 = vst [vmem:[%s269 + $0x68] sm:$0xff] %v868
        %885 = vst [vmem:[%s269 + $0x70] sm:$0xff] %v869
        %886 = vst [vmem:[%s269 + $0x78] sm:$0xff] %v870
        %s887 = sand.u32 %s166, 1
        %s888 = scalar_lea.sflag [#allocation3], %s887
        %s889 = sand.u32 %s166, 1
        %s890 = smul.addr %s889, 128
        %s891 = scalar_lea.vmem [#allocation2], %s890
        // Predicated region
        $region41: #{tpu_custom_call.1} parent=39 // pred_check
          %p892 = pneg %p176
        $region42: #{tpu_custom_call.1} parent=39 // pred_check_branch
          %894 = sbr.rel (%p892) target = $region44
        $region43: #{tpu_custom_call.1} parent=39 // pred_region
          %s895 = smul.u32 16, %s23
          %s897 = ssub.s32 2048, 2048
          %898 = vsyncadd %s888, %s897
          %s899 = sadd.s32 %s24, %s895
          %s900 = smul.addr %s899, 128
          %s901 = scalar_lea.hbm %s5, %s900
          %s902 = sshll.u32 %s891, 4
          %s903 = int_to_ptr.vmem [resolvable:$true] %s902
          %908 = dma.vmem_to_hbm [thread:$0]  %s903, 2048, %s901, %s888, 128, 128, 8
        $region44: #{tpu_custom_call.1} parent=39 // pred_fallthru
          _
      $region40: #{tpu_custom_call.1} parent=5 // pred_fallthru
        _
      %p909 = scmp.le.s32.totalorder 2, %s14
      // Predicated region
      $region45: #{tpu_custom_call.1} parent=5 // pred_check
        %p910 = pneg %p909
      $region46: #{tpu_custom_call.1} parent=5 // pred_check_branch
        %912 = sbr.rel (%p910) target = $region48
      $region47: #{tpu_custom_call.1} parent=5 // pred_region
        %s913 = ssub.s32 %s14, 2
        // Predicated region
        $region49: #{tpu_custom_call.1} parent=47 // pred_check
          %p914 = pneg %p182
        $region50: #{tpu_custom_call.1} parent=47 // pred_check_branch
          %916 = sbr.rel (%p914) target = $region52
        $region51: #{tpu_custom_call.1} parent=47 // pred_region
          %s917 = sand.u32 %s167, 1
          %s918 = scalar_lea.sflag [#allocation3], %s917
          %s919 = sand.u32 %s167, 1
          %s920 = smul.addr %s919, 128
          %s921 = scalar_lea.vmem [#allocation2], %s920
          %922 = dma.done %s918, 2048
        $region52: #{tpu_custom_call.1} parent=47 // pred_fallthru
          _
      $region48: #{tpu_custom_call.1} parent=5 // pred_fallthru
        _
    $region6: #{tpu_custom_call.1} parent=1 // loop_footer
      %s18 = sadd.s32 1, %s14
    $region7: #{tpu_custom_call.1} parent=1 // loop_footer_branch
      %13 = sbr.rel target = $region3
    $region8: #{tpu_custom_call.1} parent=1 // loop_exit
      _
    %923 = vsyncpa [#allocation3], 1
    %s924 = scalar_lea.sflag [#allocation3], 1
    %925 = vsyncpa %s924, 1

</llo_original>
